<compile_context>
chip_gen: v6e
topology: v6e:2x2x1
jax: 0.10.0
libtpu: 0.0.40
codegen_flags: <defaults>
</compile_context>

<pallas_src>
import functools
import math

import jax
import jax.numpy as jnp
import numpy as np
from jax import lax
from jax.experimental import pallas as pl
from jax.experimental.pallas import tpu as pltpu

BN_EPS = 1e-5
LANE = 128                       # pad feature/hidden dims to lane-width multiples
MXU_DTYPE = jnp.bfloat16         # MXU operand dtype; accumulation stays f32
_FALLBACK_VMEM_LIMIT = 48 * 1024 * 1024   # safe under v7x's 64 MiB physical VMEM


def _round_up(x, m):
    return ((x + m - 1) // m) * m


def _vmem_limit_bytes():
    # Generation-aware VMEM limit: ~80% of physical (v5e/v6e 128 MiB -> ~102 MiB,
    # v7x 64 MiB -> ~51 MiB).  Falls back to a v7x-safe constant.
    try:
        cap = pltpu.get_tpu_info().vmem_capacity_bytes
        return min(int(cap * 0.8), 112 * 1024 * 1024)
    except Exception:
        return _FALLBACK_VMEM_LIMIT


def graphsn_kernel(eps_ref, a_ref, x_ref,
                   w1_ref, b1_ref, g1_ref, bt1_ref,
                   w2_ref, b2_ref, g2_ref, bt2_ref,
                   w3_ref, b3_ref,
                   out_ref, *, hidden_true, tile_n, single_tile):
    B, TN, Np = a_ref.shape          # node-row tile of A (bf16)
    Fp = x_ref.shape[2]              # padded input-feature width
    Hp = w1_ref.shape[1]             # padded hidden width (multiple of 128)
    f32 = jnp.float32

    eps = eps_ref[0, 0]

    # --- neighborhood aggregation X_temp = A' @ X, A' = A with diag scaled by eps.
    # The MXU consumes the unmodified bf16 A tile; the eps-scaling of the diagonal is a
    # cheap rank-correction restricted to the (TN, TN) column window holding the diagonal:
    #   X_temp[b, n, :] += (eps - 1) * A[b, n, n] * X[b, n, :]
    x_temp = jnp.einsum('bnm,bmf->bnf', a_ref[...], x_ref[...],
                        preferred_element_type=f32)                  # [B, TN, Fp] f32

    if single_tile:
        a_win = a_ref[...]                                           # Np == TN
        x_win = x_ref[...]
    else:
        start = pl.multiple_of(pl.program_id(0) * tile_n, tile_n)    # 128/256-aligned
        a_win = a_ref[:, :, pl.ds(start, TN)]                        # [B, TN, TN]
        x_win = x_ref[:, pl.ds(start, TN), :]                        # [B, TN, Fp]
    eye = (lax.broadcasted_iota(jnp.int32, (TN, TN), 0) ==
           lax.broadcasted_iota(jnp.int32, (TN, TN), 1))
    diag_a = jnp.sum(jnp.where(eye[None], a_win.astype(f32), 0.0),
                     axis=2, keepdims=True)                          # [B, TN, 1]
    x_temp = x_temp + (eps - 1.0) * diag_a * x_win.astype(f32)

    # Keep the activation as one lane-dense 2-D slab [B*TN, D] for the whole MLP.
    h = x_temp.reshape(B * TN, Fp)
    inv_count = 1.0 / (B * hidden_true)   # BN counts only the un-padded hidden lanes

    def linear(h2, w_ref, b_ref):
        # weights are pre-cast bf16; only the freshly computed activation is cast here.
        y = jnp.dot(h2.astype(MXU_DTYPE), w_ref[...], preferred_element_type=f32)
        return y + b_ref[...]                                        # [B*TN, Hp] f32

    def relu_bn(h2, g_ref, bt_ref):
        # ReLU then BatchNorm1d(num_features = nodes): per-node stats over (batch, hidden),
        # training-mode biased variance, one pass (sum & sum-of-squares), fused scale+shift.
        h2 = jnp.maximum(h2, 0.0)
        h3 = h2.reshape(B, TN, Hp)                                   # tile-aligned view
        s = jnp.sum(h3, axis=(0, 2), keepdims=True)                  # [1, TN, 1]
        sq = jnp.sum(h3 * h3, axis=(0, 2), keepdims=True)            # [1, TN, 1]
        mean = s * inv_count
        var = jnp.maximum(sq * inv_count - mean * mean, 0.0)
        inv_std = lax.rsqrt(var + BN_EPS)
        scale = g_ref[...][None] * inv_std                           # [1, TN, 1]
        shift = bt_ref[...][None] - mean * scale                     # [1, TN, 1]
        return (h3 * scale + shift).reshape(B * TN, Hp)              # lane splat of scale/shift

    # MLP block 1: Linear -> (Dropout) -> ReLU -> BatchNorm1d
    # TODO(synk): Dropout is stochastic; treated as identity (eval-mode dropout).
    h = relu_bn(linear(h, w1_ref, b1_ref), g1_ref, bt1_ref)
    # MLP block 2: Linear -> (Dropout) -> ReLU -> BatchNorm1d
    h = relu_bn(linear(h, w2_ref, b2_ref), g2_ref, bt2_ref)
    # final Linear + ReLU
    h = jnp.maximum(linear(h, w3_ref, b3_ref), 0.0)

    out_ref[...] = h.reshape(B, TN, Hp)


@jax.jit
def graphsn_forward(A, X, params):
    B, N, _ = A.shape
    F_in = X.shape[-1]
    H = params['w1'].shape[1]
    f32 = jnp.float32

    # ---- pad to lane/tile-friendly shapes (zero padding is exact through the math;
    #      correctness relies on the padded weight rows/cols staying exactly zero) ----
    Fp = _round_up(F_in, LANE)
    Hp = _round_up(H, LANE)
    # B*TN == 256 keeps the 256-wide MXU (v6e/v7x) full; v5e's 128-wide MXU is fine too.
    max_tile = 256 if B == 1 else 128
    if N <= max_tile:
        TN = Np = N                       # single node tile; full-dim blocks
    else:
        TN = max_tile
        Np = _round_up(N, TN)
    num_tiles = Np // TN
    single_tile = num_tiles == 1

    # Pre-cast MXU operands to bf16 in the wrapper (layout/dtype plumbing only): halves
    # the streamed A DMA + resident VMEM and removes per-grid-step casts in the kernel.
    A_p = jnp.zeros((B, Np, Np), MXU_DTYPE).at[:, :N, :N].set(A.astype(MXU_DTYPE))
    X_p = jnp.zeros((B, Np, Fp), MXU_DTYPE).at[:, :N, :F_in].set(X.astype(MXU_DTYPE))

    def pad_w(w):
        din, dout = w.shape
        return (jnp.zeros((_round_up(din, LANE), Hp), MXU_DTYPE)
                .at[:din, :dout].set(w.astype(MXU_DTYPE)))

    def pad_b(b):
        return jnp.zeros((1, Hp), f32).at[0, :b.shape[0]].set(b)

    def pad_bn(v, fill):
        # per-node BN param as a (Np, 1) column; lane broadcast happens in-kernel.
        return jnp.full((Np, 1), fill, f32).at[:N, 0].set(v)

    eps = params['eps'].reshape(1, 1).astype(f32)
    w1, b1 = pad_w(params['w1']), pad_b(params['b1'])
    w2, b2 = pad_w(params['w2']), pad_b(params['b2'])
    w3, b3 = pad_w(params['w3']), pad_b(params['b3'])
    g1, bt1 = pad_bn(params['g1'], 1.0), pad_bn(params['bt1'], 0.0)
    g2, bt2 = pad_bn(params['g2'], 1.0), pad_bn(params['bt2'], 0.0)

    # Constant-index blocks never change across the grid -> single-buffer them
    # (the default second pipeline buffer would be dead VMEM).
    resident = pl.Buffered(1)
    const3 = lambda i: (0, 0, 0)
    const2 = lambda i: (0, 0)
    node_col = lambda i: (i, 0)

    in_specs = [
        pl.BlockSpec(memory_space=pltpu.MemorySpace.SMEM),                 # eps scalar
        pl.BlockSpec((B, TN, Np), lambda i: (0, i, 0)),                    # A: streamed node-row tiles
        pl.BlockSpec((B, Np, Fp), const3, pipeline_mode=resident),         # X: VMEM-resident
        pl.BlockSpec((Fp, Hp), const2, pipeline_mode=resident),            # W1
        pl.BlockSpec((1, Hp), const2, pipeline_mode=resident),             # b1
        pl.BlockSpec((TN, 1), node_col),                                   # gamma1 (per-node column)
        pl.BlockSpec((TN, 1), node_col),                                   # beta1
        pl.BlockSpec((Hp, Hp), const2, pipeline_mode=resident),            # W2
        pl.BlockSpec((1, Hp), const2, pipeline_mode=resident),             # b2
        pl.BlockSpec((TN, 1), node_col),                                   # gamma2
        pl.BlockSpec((TN, 1), node_col),                                   # beta2
        pl.BlockSpec((Hp, Hp), const2, pipeline_mode=resident),            # W3
        pl.BlockSpec((1, Hp), const2, pipeline_mode=resident),             # b3
    ]
    out_spec = pl.BlockSpec((B, TN, Hp), lambda i: (0, i, 0))

    kernel = functools.partial(graphsn_kernel, hidden_true=H, tile_n=TN,
                               single_tile=single_tile)

    out_p = pl.pallas_call(
        kernel,
        out_shape=jax.ShapeDtypeStruct((B, Np, Hp), f32),
        grid=(num_tiles,),
        in_specs=in_specs,
        out_specs=out_spec,
        compiler_params=pltpu.CompilerParams(
            # node tiles are independent (BN is per node) -> shard across v7x's 2 TCs
            dimension_semantics=("parallel",),
            vmem_limit_bytes=_vmem_limit_bytes(),
        ),
    )(eps, A_p, X_p, w1, b1, g1, bt1, w2, b2, g2, bt2, w3, b3)

    return out_p[:, :N, :H]


def reference_forward(A, X, params, mxu_dtype=None):
    """Pure-JAX reference mirroring the PyTorch forward (dropout = identity).

    mxu_dtype=None reproduces exact-f32 math; mxu_dtype=jnp.bfloat16 applies the same
    operand rounding the kernel uses at MXU boundaries (f32 accumulation everywhere).
    """
    cast = (lambda t: t.astype(mxu_dtype)) if mxu_dtype is not None else (lambda t: t)
    N = A.shape[1]
    eps = params['eps'][0]
    A_mod = jnp.where(jnp.eye(N, dtype=bool)[None, :, :], eps * A, A)
    x = jnp.einsum('bnm,bmf->bnf', cast(A_mod), cast(X),
                   preferred_element_type=jnp.float32)

    def lin(h, w, b):
        return jnp.einsum('bnf,fh->bnh', cast(h), cast(w),
                          preferred_element_type=jnp.float32) + b

    def bn(h, g, bt):
        mean = jnp.mean(h, axis=(0, 2), keepdims=True)
        var = jnp.mean((h - mean) ** 2, axis=(0, 2), keepdims=True)
        return (h - mean) * lax.rsqrt(var + BN_EPS) * g[None, :, None] + bt[None, :, None]

    h = bn(jnp.maximum(lin(x, params['w1'], params['b1']), 0.0), params['g1'], params['bt1'])
    h = bn(jnp.maximum(lin(h, params['w2'], params['b2']), 0.0), params['g2'], params['bt2'])
    return jnp.maximum(lin(h, params['w3'], params['b3']), 0.0)


def init_params(key, input_dim, hidden_dim, batchnorm_dim):
    ks = jax.random.split(key, 6)

    def linear_init(kw, kb, d_in, d_out):
        bound = 1.0 / math.sqrt(d_in)
        w = jax.random.uniform(kw, (d_in, d_out), jnp.float32, -bound, bound)
        b = jax.random.uniform(kb, (d_out,), jnp.float32, -bound, bound)
        return w, b

    w1, b1 = linear_init(ks[0], ks[1], input_dim, hidden_dim)
    w2, b2 = linear_init(ks[2], ks[3], hidden_dim, hidden_dim)
    w3, b3 = linear_init(ks[4], ks[5], hidden_dim, hidden_dim)
    return {
        'eps': jnp.array([0.25 / math.sqrt(1)], jnp.float32),   # reset_parameters()
        'w1': w1, 'b1': b1,
        'g1': jnp.ones((batchnorm_dim,), jnp.float32),
        'bt1': jnp.zeros((batchnorm_dim,), jnp.float32),
        'w2': w2, 'b2': b2,
        'g2': jnp.ones((batchnorm_dim,), jnp.float32),
        'bt2': jnp.zeros((batchnorm_dim,), jnp.float32),
        'w3': w3, 'b3': b3,
    }


if __name__ == "__main__":
    B, N, F_IN, HID = 2, 8, 16, 32        # batchnorm_dim == N (nodes)
    key = jax.random.PRNGKey(0)
    ka, kx, kp = jax.random.split(key, 3)

    # symmetric-ish adjacency with self-loops
    A_raw = jax.random.uniform(ka, (B, N, N), jnp.float32)
    A = 0.5 * (A_raw + jnp.swapaxes(A_raw, 1, 2)) + jnp.eye(N)[None]
    X = jax.random.normal(kx, (B, N, F_IN), jnp.float32)

    params = init_params(kp, F_IN, HID, N)

    out = jax.block_until_ready(graphsn_forward(A, X, params))

    # Tight check vs. a reference with the same bf16 MXU-operand rounding (slightly looser
    # than bit-match since the kernel applies the diagonal eps-scaling as an f32 correction).
    ref_match = reference_forward(A, X, params, mxu_dtype=MXU_DTYPE)
    np.testing.assert_allclose(np.asarray(out), np.asarray(ref_match), rtol=2e-2, atol=2e-2)
    # Loose check vs. exact-f32 PyTorch-equivalent math (bf16 operand error budget).
    ref_f32 = reference_forward(A, X, params, mxu_dtype=None)
    np.testing.assert_allclose(np.asarray(out), np.asarray(ref_f32), rtol=1e-1, atol=1e-1)

    print("KERNEL_OK")
</pallas_src>

<mosaic_0001>
module attributes {stable_mosaic.version = 11 : i64} {
  func.func @graphsn_kernel(%arg0: i32, %arg1: memref<1x1xf32, #tpu.memory_space<smem>>, %arg2: memref<2x8x8xbf16, #tpu.memory_space<vmem>>, %arg3: memref<2x8x128xbf16, #tpu.memory_space<vmem>>, %arg4: memref<128x128xbf16, #tpu.memory_space<vmem>>, %arg5: memref<1x128xf32, #tpu.memory_space<vmem>>, %arg6: memref<8x1xf32, #tpu.memory_space<vmem>>, %arg7: memref<8x1xf32, #tpu.memory_space<vmem>>, %arg8: memref<128x128xbf16, #tpu.memory_space<vmem>>, %arg9: memref<1x128xf32, #tpu.memory_space<vmem>>, %arg10: memref<8x1xf32, #tpu.memory_space<vmem>>, %arg11: memref<8x1xf32, #tpu.memory_space<vmem>>, %arg12: memref<128x128xbf16, #tpu.memory_space<vmem>>, %arg13: memref<1x128xf32, #tpu.memory_space<vmem>>, %arg14: memref<2x8x128xf32, #tpu.memory_space<vmem>>) attributes {dimension_semantics = [#tpu.dimension_semantics<parallel>], iteration_bounds = array<i64: 1>, scalar_prefetch = 0 : i64, scratch_operands = 0 : i64, tpu.core_type = #tpu.core_type<tc>, window_params = [{transform_indices = @transform_0, window_bounds = array<i64: 1, 1>}, {transform_indices = @transform_1, window_bounds = array<i64: 2, 8, 8>}, {pipeline_mode = #tpu.pipeline_mode<synchronous>, transform_indices = @transform_2, window_bounds = array<i64: 2, 8, 128>}, {pipeline_mode = #tpu.pipeline_mode<synchronous>, transform_indices = @transform_3, window_bounds = array<i64: 128, 128>}, {pipeline_mode = #tpu.pipeline_mode<synchronous>, transform_indices = @transform_4, window_bounds = array<i64: 1, 128>}, {transform_indices = @transform_5, window_bounds = array<i64: 8, 1>}, {transform_indices = @transform_6, window_bounds = array<i64: 8, 1>}, {pipeline_mode = #tpu.pipeline_mode<synchronous>, transform_indices = @transform_7, window_bounds = array<i64: 128, 128>}, {pipeline_mode = #tpu.pipeline_mode<synchronous>, transform_indices = @transform_8, window_bounds = array<i64: 1, 128>}, {transform_indices = @transform_9, window_bounds = array<i64: 8, 1>}, {transform_indices = @transform_10, window_bounds = array<i64: 8, 1>}, {pipeline_mode = #tpu.pipeline_mode<synchronous>, transform_indices = @transform_11, window_bounds = array<i64: 128, 128>}, {pipeline_mode = #tpu.pipeline_mode<synchronous>, transform_indices = @transform_12, window_bounds = array<i64: 1, 128>}, {transform_indices = @transform_13, window_bounds = array<i64: 2, 8, 128>}]} {
    %c0 = arith.constant 0 : index
    %c0_0 = arith.constant 0 : index
    %0 = memref.load %arg1[%c0, %c0_0] : memref<1x1xf32, #tpu.memory_space<smem>>
    %c0_1 = arith.constant 0 : index
    %c0_2 = arith.constant 0 : index
    %c0_3 = arith.constant 0 : index
    %1 = vector.load %arg2[%c0_1, %c0_2, %c0_3] : memref<2x8x8xbf16, #tpu.memory_space<vmem>>, vector<2x8x8xbf16>
    %c0_4 = arith.constant 0 : index
    %c0_5 = arith.constant 0 : index
    %c0_6 = arith.constant 0 : index
    %2 = vector.load %arg3[%c0_4, %c0_5, %c0_6] : memref<2x8x128xbf16, #tpu.memory_space<vmem>>, vector<2x8x128xbf16>
    "tpu.trace_start"() <{level = 10 : i32, message = "bnm,bmf->bnf"}> : () -> ()
    %cst = arith.constant dense<0.000000e+00> : vector<2x8x128xf32>
    %3 = tpu.matmul %1, %2, %cst {dimension_numbers = #tpu.dot_dimension_numbers<[2], [1], [1], [2], [0, 0, 0, 1, 1, 2], [0], [0]>} : vector<2x8x8xbf16>, vector<2x8x128xbf16>, vector<2x8x128xf32> -> vector<2x8x128xf32>
    "tpu.trace_stop"() : () -> ()
    %c0_7 = arith.constant 0 : index
    %c0_8 = arith.constant 0 : index
    %c0_9 = arith.constant 0 : index
    %4 = vector.load %arg2[%c0_7, %c0_8, %c0_9] : memref<2x8x8xbf16, #tpu.memory_space<vmem>>, vector<2x8x8xbf16>
    %c0_10 = arith.constant 0 : index
    %c0_11 = arith.constant 0 : index
    %c0_12 = arith.constant 0 : index
    %5 = vector.load %arg3[%c0_10, %c0_11, %c0_12] : memref<2x8x128xbf16, #tpu.memory_space<vmem>>, vector<2x8x128xbf16>
    %6 = tpu.iota {dimensions = array<i32: 0>} : vector<8x8xi32>
    %7 = tpu.iota {dimensions = array<i32: 1>} : vector<8x8xi32>
    %8 = arith.cmpi eq, %6, %7 : vector<8x8xi32>
    %9 = vector.shape_cast %8 : vector<8x8xi1> to vector<1x8x8xi1>
    %10 = arith.extf %4 : vector<2x8x8xbf16> to vector<2x8x8xf32>
    %cst_13 = arith.constant 0.000000e+00 : f32
    %11 = vector.shape_cast %9 : vector<1x8x8xi1> to vector<1x8x8xi1>
    %12 = vector.broadcast %11 : vector<1x8x8xi1> to vector<2x8x8xi1>
    %13 = vector.broadcast %cst_13 : f32 to vector<2x8x8xf32>
    %14 = arith.select %12, %10, %13 : vector<2x8x8xi1>, vector<2x8x8xf32>
    %cst_14 = arith.constant dense<0.000000e+00> : vector<2x8xf32>
    %15 = vector.multi_reduction <add>, %14, %cst_14 [2] : vector<2x8x8xf32> to vector<2x8xf32>
    %16 = vector.shape_cast %15 : vector<2x8xf32> to vector<2x8x1xf32>
    %cst_15 = arith.constant 1.000000e+00 : f32
    %17 = arith.subf %0, %cst_15 : f32
    %18 = vector.broadcast %17 : f32 to vector<2x8x1xf32>
    %19 = arith.mulf %18, %16 : vector<2x8x1xf32>
    %20 = arith.extf %5 : vector<2x8x128xbf16> to vector<2x8x128xf32>
    %21 = vector.broadcast %19 : vector<2x8x1xf32> to vector<2x8x128xf32>
    %22 = arith.mulf %21, %20 : vector<2x8x128xf32>
    %23 = arith.addf %3, %22 : vector<2x8x128xf32>
    %24 = vector.shape_cast %23 : vector<2x8x128xf32> to vector<16x128xf32>
    %25 = arith.truncf %24 : vector<16x128xf32> to vector<16x128xbf16>
    %c0_16 = arith.constant 0 : index
    %c0_17 = arith.constant 0 : index
    %26 = vector.load %arg4[%c0_16, %c0_17] : memref<128x128xbf16, #tpu.memory_space<vmem>>, vector<128x128xbf16>
    %cst_18 = arith.constant dense<0.000000e+00> : vector<16x128xf32>
    %27 = tpu.matmul %25, %26, %cst_18 {dimension_numbers = #tpu.dot_dimension_numbers<[1], [0], [0], [1], [0, 0, 1, 1], [], []>} : vector<16x128xbf16>, vector<128x128xbf16>, vector<16x128xf32> -> vector<16x128xf32>
    %c0_19 = arith.constant 0 : index
    %c0_20 = arith.constant 0 : index
    %28 = vector.load %arg5[%c0_19, %c0_20] : memref<1x128xf32, #tpu.memory_space<vmem>>, vector<1x128xf32>
    %29 = vector.broadcast %28 : vector<1x128xf32> to vector<16x128xf32>
    %30 = arith.addf %27, %29 : vector<16x128xf32>
    %cst_21 = arith.constant 0.000000e+00 : f32
    %31 = vector.broadcast %cst_21 : f32 to vector<16x128xf32>
    %32 = arith.maximumf %30, %31 : vector<16x128xf32>
    %33 = vector.shape_cast %32 : vector<16x128xf32> to vector<2x8x128xf32>
    %cst_22 = arith.constant dense<0.000000e+00> : vector<8xf32>
    %34 = vector.multi_reduction <add>, %33, %cst_22 [0, 2] : vector<2x8x128xf32> to vector<8xf32>
    %35 = vector.shape_cast %34 : vector<8xf32> to vector<1x8x1xf32>
    %36 = arith.mulf %33, %33 : vector<2x8x128xf32>
    %cst_23 = arith.constant dense<0.000000e+00> : vector<8xf32>
    %37 = vector.multi_reduction <add>, %36, %cst_23 [0, 2] : vector<2x8x128xf32> to vector<8xf32>
    %38 = vector.shape_cast %37 : vector<8xf32> to vector<1x8x1xf32>
    %cst_24 = arith.constant 1.562500e-02 : f32
    %39 = vector.broadcast %cst_24 : f32 to vector<1x8x1xf32>
    %40 = arith.mulf %35, %39 : vector<1x8x1xf32>
    %cst_25 = arith.constant 1.562500e-02 : f32
    %41 = vector.broadcast %cst_25 : f32 to vector<1x8x1xf32>
    %42 = arith.mulf %38, %41 : vector<1x8x1xf32>
    %43 = arith.mulf %40, %40 : vector<1x8x1xf32>
    %44 = arith.subf %42, %43 : vector<1x8x1xf32>
    %cst_26 = arith.constant 0.000000e+00 : f32
    %45 = vector.broadcast %cst_26 : f32 to vector<1x8x1xf32>
    %46 = arith.maximumf %44, %45 : vector<1x8x1xf32>
    %cst_27 = arith.constant 9.99999974E-6 : f32
    %47 = vector.broadcast %cst_27 : f32 to vector<1x8x1xf32>
    %48 = arith.addf %46, %47 : vector<1x8x1xf32>
    %49 = math.rsqrt %48 : vector<1x8x1xf32>
    %c0_28 = arith.constant 0 : index
    %c0_29 = arith.constant 0 : index
    %50 = vector.load %arg6[%c0_28, %c0_29] : memref<8x1xf32, #tpu.memory_space<vmem>>, vector<8x1xf32>
    %51 = vector.shape_cast %50 : vector<8x1xf32> to vector<1x8x1xf32>
    %52 = arith.mulf %51, %49 : vector<1x8x1xf32>
    %c0_30 = arith.constant 0 : index
    %c0_31 = arith.constant 0 : index
    %53 = vector.load %arg7[%c0_30, %c0_31] : memref<8x1xf32, #tpu.memory_space<vmem>>, vector<8x1xf32>
    %54 = vector.shape_cast %53 : vector<8x1xf32> to vector<1x8x1xf32>
    %55 = arith.mulf %40, %52 : vector<1x8x1xf32>
    %56 = arith.subf %54, %55 : vector<1x8x1xf32>
    %57 = vector.broadcast %52 : vector<1x8x1xf32> to vector<2x8x128xf32>
    %58 = arith.mulf %33, %57 : vector<2x8x128xf32>
    %59 = vector.broadcast %56 : vector<1x8x1xf32> to vector<2x8x128xf32>
    %60 = arith.addf %58, %59 : vector<2x8x128xf32>
    %61 = vector.shape_cast %60 : vector<2x8x128xf32> to vector<16x128xf32>
    %62 = arith.truncf %61 : vector<16x128xf32> to vector<16x128xbf16>
    %c0_32 = arith.constant 0 : index
    %c0_33 = arith.constant 0 : index
    %63 = vector.load %arg8[%c0_32, %c0_33] : memref<128x128xbf16, #tpu.memory_space<vmem>>, vector<128x128xbf16>
    %cst_34 = arith.constant dense<0.000000e+00> : vector<16x128xf32>
    %64 = tpu.matmul %62, %63, %cst_34 {dimension_numbers = #tpu.dot_dimension_numbers<[1], [0], [0], [1], [0, 0, 1, 1], [], []>} : vector<16x128xbf16>, vector<128x128xbf16>, vector<16x128xf32> -> vector<16x128xf32>
    %c0_35 = arith.constant 0 : index
    %c0_36 = arith.constant 0 : index
    %65 = vector.load %arg9[%c0_35, %c0_36] : memref<1x128xf32, #tpu.memory_space<vmem>>, vector<1x128xf32>
    %66 = vector.broadcast %65 : vector<1x128xf32> to vector<16x128xf32>
    %67 = arith.addf %64, %66 : vector<16x128xf32>
    %cst_37 = arith.constant 0.000000e+00 : f32
    %68 = vector.broadcast %cst_37 : f32 to vector<16x128xf32>
    %69 = arith.maximumf %67, %68 : vector<16x128xf32>
    %70 = vector.shape_cast %69 : vector<16x128xf32> to vector<2x8x128xf32>
    %cst_38 = arith.constant dense<0.000000e+00> : vector<8xf32>
    %71 = vector.multi_reduction <add>, %70, %cst_38 [0, 2] : vector<2x8x128xf32> to vector<8xf32>
    %72 = vector.shape_cast %71 : vector<8xf32> to vector<1x8x1xf32>
    %73 = arith.mulf %70, %70 : vector<2x8x128xf32>
    %cst_39 = arith.constant dense<0.000000e+00> : vector<8xf32>
    %74 = vector.multi_reduction <add>, %73, %cst_39 [0, 2] : vector<2x8x128xf32> to vector<8xf32>
    %75 = vector.shape_cast %74 : vector<8xf32> to vector<1x8x1xf32>
    %cst_40 = arith.constant 1.562500e-02 : f32
    %76 = vector.broadcast %cst_40 : f32 to vector<1x8x1xf32>
    %77 = arith.mulf %72, %76 : vector<1x8x1xf32>
    %cst_41 = arith.constant 1.562500e-02 : f32
    %78 = vector.broadcast %cst_41 : f32 to vector<1x8x1xf32>
    %79 = arith.mulf %75, %78 : vector<1x8x1xf32>
    %80 = arith.mulf %77, %77 : vector<1x8x1xf32>
    %81 = arith.subf %79, %80 : vector<1x8x1xf32>
    %cst_42 = arith.constant 0.000000e+00 : f32
    %82 = vector.broadcast %cst_42 : f32 to vector<1x8x1xf32>
    %83 = arith.maximumf %81, %82 : vector<1x8x1xf32>
    %cst_43 = arith.constant 9.99999974E-6 : f32
    %84 = vector.broadcast %cst_43 : f32 to vector<1x8x1xf32>
    %85 = arith.addf %83, %84 : vector<1x8x1xf32>
    %86 = math.rsqrt %85 : vector<1x8x1xf32>
    %c0_44 = arith.constant 0 : index
    %c0_45 = arith.constant 0 : index
    %87 = vector.load %arg10[%c0_44, %c0_45] : memref<8x1xf32, #tpu.memory_space<vmem>>, vector<8x1xf32>
    %88 = vector.shape_cast %87 : vector<8x1xf32> to vector<1x8x1xf32>
    %89 = arith.mulf %88, %86 : vector<1x8x1xf32>
    %c0_46 = arith.constant 0 : index
    %c0_47 = arith.constant 0 : index
    %90 = vector.load %arg11[%c0_46, %c0_47] : memref<8x1xf32, #tpu.memory_space<vmem>>, vector<8x1xf32>
    %91 = vector.shape_cast %90 : vector<8x1xf32> to vector<1x8x1xf32>
    %92 = arith.mulf %77, %89 : vector<1x8x1xf32>
    %93 = arith.subf %91, %92 : vector<1x8x1xf32>
    %94 = vector.broadcast %89 : vector<1x8x1xf32> to vector<2x8x128xf32>
    %95 = arith.mulf %70, %94 : vector<2x8x128xf32>
    %96 = vector.broadcast %93 : vector<1x8x1xf32> to vector<2x8x128xf32>
    %97 = arith.addf %95, %96 : vector<2x8x128xf32>
    %98 = vector.shape_cast %97 : vector<2x8x128xf32> to vector<16x128xf32>
    %99 = arith.truncf %98 : vector<16x128xf32> to vector<16x128xbf16>
    %c0_48 = arith.constant 0 : index
    %c0_49 = arith.constant 0 : index
    %100 = vector.load %arg12[%c0_48, %c0_49] : memref<128x128xbf16, #tpu.memory_space<vmem>>, vector<128x128xbf16>
    %cst_50 = arith.constant dense<0.000000e+00> : vector<16x128xf32>
    %101 = tpu.matmul %99, %100, %cst_50 {dimension_numbers = #tpu.dot_dimension_numbers<[1], [0], [0], [1], [0, 0, 1, 1], [], []>} : vector<16x128xbf16>, vector<128x128xbf16>, vector<16x128xf32> -> vector<16x128xf32>
    %c0_51 = arith.constant 0 : index
    %c0_52 = arith.constant 0 : index
    %102 = vector.load %arg13[%c0_51, %c0_52] : memref<1x128xf32, #tpu.memory_space<vmem>>, vector<1x128xf32>
    %103 = vector.broadcast %102 : vector<1x128xf32> to vector<16x128xf32>
    %104 = arith.addf %101, %103 : vector<16x128xf32>
    %cst_53 = arith.constant 0.000000e+00 : f32
    %105 = vector.broadcast %cst_53 : f32 to vector<16x128xf32>
    %106 = arith.maximumf %104, %105 : vector<16x128xf32>
    %107 = vector.shape_cast %106 : vector<16x128xf32> to vector<2x8x128xf32>
    %c0_54 = arith.constant 0 : index
    %c0_55 = arith.constant 0 : index
    %c0_56 = arith.constant 0 : index
    %108 = vector.load %arg14[%c0_54, %c0_55, %c0_56] : memref<2x8x128xf32, #tpu.memory_space<vmem>>, vector<2x8x128xf32>
    tpu.vector_store %arg14[%c0_54, %c0_55, %c0_56], %107 {strides = array<i32>} : memref<2x8x128xf32, #tpu.memory_space<vmem>>, vector<2x8x128xf32>,
    return
  }
  func.func @transform_0(%arg0: i32) -> (i32, i32) {
    %c0_i32 = arith.constant 0 : i32
    %c0_i32_0 = arith.constant 0 : i32
    %c0_i32_1 = arith.constant 0 : i32
    return %c0_i32, %c0_i32_0 : i32, i32
  }
  func.func @transform_1(%arg0: i32) -> (i32, i32, i32) {
    %c0_i32 = arith.constant 0 : i32
    %c0_i32_0 = arith.constant 0 : i32
    %c0_i32_1 = arith.constant 0 : i32
    return %c0_i32, %arg0, %c0_i32_0 : i32, i32, i32
  }
  func.func @transform_2(%arg0: i32) -> (i32, i32, i32) {
    %c0_i32 = arith.constant 0 : i32
    %c0_i32_0 = arith.constant 0 : i32
    %c0_i32_1 = arith.constant 0 : i32
    %c0_i32_2 = arith.constant 0 : i32
    return %c0_i32, %c0_i32_0, %c0_i32_1 : i32, i32, i32
  }
  func.func @transform_3(%arg0: i32) -> (i32, i32) {
    %c0_i32 = arith.constant 0 : i32
    %c0_i32_0 = arith.constant 0 : i32
    %c0_i32_1 = arith.constant 0 : i32
    return %c0_i32, %c0_i32_0 : i32, i32
  }
  func.func @transform_4(%arg0: i32) -> (i32, i32) {
    %c0_i32 = arith.constant 0 : i32
    %c0_i32_0 = arith.constant 0 : i32
    %c0_i32_1 = arith.constant 0 : i32
    return %c0_i32, %c0_i32_0 : i32, i32
  }
  func.func @transform_5(%arg0: i32) -> (i32, i32) {
    %c0_i32 = arith.constant 0 : i32
    %c0_i32_0 = arith.constant 0 : i32
    return %arg0, %c0_i32 : i32, i32
  }
  func.func @transform_6(%arg0: i32) -> (i32, i32) {
    %c0_i32 = arith.constant 0 : i32
    %c0_i32_0 = arith.constant 0 : i32
    return %arg0, %c0_i32 : i32, i32
  }
  func.func @transform_7(%arg0: i32) -> (i32, i32) {
    %c0_i32 = arith.constant 0 : i32
    %c0_i32_0 = arith.constant 0 : i32
    %c0_i32_1 = arith.constant 0 : i32
    return %c0_i32, %c0_i32_0 : i32, i32
  }
  func.func @transform_8(%arg0: i32) -> (i32, i32) {
    %c0_i32 = arith.constant 0 : i32
    %c0_i32_0 = arith.constant 0 : i32
    %c0_i32_1 = arith.constant 0 : i32
    return %c0_i32, %c0_i32_0 : i32, i32
  }
  func.func @transform_9(%arg0: i32) -> (i32, i32) {
    %c0_i32 = arith.constant 0 : i32
    %c0_i32_0 = arith.constant 0 : i32
    return %arg0, %c0_i32 : i32, i32
  }
  func.func @transform_10(%arg0: i32) -> (i32, i32) {
    %c0_i32 = arith.constant 0 : i32
    %c0_i32_0 = arith.constant 0 : i32
    return %arg0, %c0_i32 : i32, i32
  }
  func.func @transform_11(%arg0: i32) -> (i32, i32) {
    %c0_i32 = arith.constant 0 : i32
    %c0_i32_0 = arith.constant 0 : i32
    %c0_i32_1 = arith.constant 0 : i32
    return %c0_i32, %c0_i32_0 : i32, i32
  }
  func.func @transform_12(%arg0: i32) -> (i32, i32) {
    %c0_i32 = arith.constant 0 : i32
    %c0_i32_0 = arith.constant 0 : i32
    %c0_i32_1 = arith.constant 0 : i32
    return %c0_i32, %c0_i32_0 : i32, i32
  }
  func.func @transform_13(%arg0: i32) -> (i32, i32, i32) {
    %c0_i32 = arith.constant 0 : i32
    %c0_i32_0 = arith.constant 0 : i32
    %c0_i32_1 = arith.constant 0 : i32
    return %c0_i32, %arg0, %c0_i32_0 : i32, i32, i32
  }
}

</mosaic_0001>

<llo_original>
// kernel: graphsn_forward.1
$region0: #{graphsn_forward.1}
  #allocation0 [shape = 'u32[]', space=smem, size = 0x4, offset = 0x4, fixed_abs, tag = 'smem constant byte address 0x4 - core index']
  #allocation1 [shape = 'u32[144,128]{1,0:T(1,128)}', space=vmem, size = 0x12000, scoped, tag = 'internal scratch']
  #allocation2 [shape = 'f32[1,1]{1,0:T(1,128)S(6)}', space=smem, size = 0x200, scoped, tag = 'scoped memory for graphsn_forward.1']
  %s0 = inlined_call_operand.<no memory space> [shape: f32[1,1], index: 0, kind: input, shape index: {}]
  %s1 = inlined_call_operand.vmem [shape: bf16[2,8,8], index: 1, kind: input, shape index: {}]
  %s2 = inlined_call_operand.vmem [shape: bf16[2,8,128], index: 2, kind: input, shape index: {}]
  %s3 = inlined_call_operand.vmem [shape: bf16[128,128], index: 3, kind: input, shape index: {}]
  %s4 = inlined_call_operand.vmem [shape: f32[1,128], index: 4, kind: input, shape index: {}]
  %s5 = inlined_call_operand.vmem [shape: f32[8,1], index: 5, kind: input, shape index: {}]
  %s6 = inlined_call_operand.vmem [shape: f32[8,1], index: 6, kind: input, shape index: {}]
  %s7 = inlined_call_operand.vmem [shape: bf16[128,128], index: 7, kind: input, shape index: {}]
  %s8 = inlined_call_operand.vmem [shape: f32[1,128], index: 8, kind: input, shape index: {}]
  %s9 = inlined_call_operand.vmem [shape: f32[8,1], index: 9, kind: input, shape index: {}]
  %s10 = inlined_call_operand.vmem [shape: f32[8,1], index: 10, kind: input, shape index: {}]
  %s11 = inlined_call_operand.vmem [shape: bf16[128,128], index: 11, kind: input, shape index: {}]
  %s12 = inlined_call_operand.vmem [shape: f32[1,128], index: 12, kind: input, shape index: {}]
  %s13 = inlined_call_operand.hbm [shape: f32[2,8,128], index: 13, kind: output, shape index: {}]
  %s14 = sld [smem:[#allocation0]]
  $region62: #{graphsn_forward.1} parent=0
    _
  %s16 = ssub.s32 1, %s14
  %s17 = scalar_select 0, %s16, %s14
  %18 = sst [smem:[#allocation2]] %s0
  $region1: #{graphsn_forward.1} parent=0
    #allocation3 [shape = 'u8[8192]{0}', space=vmem, size = 0x2000, scoped, tag = 'output window, operand 0, single buffered']
    #allocation4 [shape = 's32[1]{0}', space=sflag, size = 0x4, scoped, tag = 'scoped memory for graphsn_forward.1']
    %19 = vsyncpa [#allocation4], 0
    // Predicated region
    $region2: #{graphsn_forward.1} parent=1 // pred_check
      _
    $region3: #{graphsn_forward.1} parent=1 // pred_check_branch
      %21 = sbr.rel (0) target = $region5
    $region4: #{graphsn_forward.1} parent=1 // pred_region
      _
    $region5: #{graphsn_forward.1} parent=1 // pred_fallthru
      _
    // Predicated region
    $region6: #{graphsn_forward.1} parent=1 // pred_check
      _
    $region7: #{graphsn_forward.1} parent=1 // pred_check_branch
      %23 = sbr.rel (0) target = $region9
    $region8: #{graphsn_forward.1} parent=1 // pred_region
      _
    $region9: #{graphsn_forward.1} parent=1 // pred_fallthru
      _
    // Predicated region
    $region10: #{graphsn_forward.1} parent=1 // pred_check
      _
    $region11: #{graphsn_forward.1} parent=1 // pred_check_branch
      %25 = sbr.rel (0) target = $region13
    $region12: #{graphsn_forward.1} parent=1 // pred_region
      _
    $region13: #{graphsn_forward.1} parent=1 // pred_fallthru
      _
    // Predicated region
    $region14: #{graphsn_forward.1} parent=1 // pred_check
      _
    $region15: #{graphsn_forward.1} parent=1 // pred_check_branch
      %27 = sbr.rel (0) target = $region17
    $region16: #{graphsn_forward.1} parent=1 // pred_region
      _
    $region17: #{graphsn_forward.1} parent=1 // pred_fallthru
      _
    // Predicated region
    $region18: #{graphsn_forward.1} parent=1 // pred_check
      _
    $region19: #{graphsn_forward.1} parent=1 // pred_check_branch
      %29 = sbr.rel (0) target = $region21
    $region20: #{graphsn_forward.1} parent=1 // pred_region
      _
    $region21: #{graphsn_forward.1} parent=1 // pred_fallthru
      _
    // Predicated region
    $region22: #{graphsn_forward.1} parent=1 // pred_check
      _
    $region23: #{graphsn_forward.1} parent=1 // pred_check_branch
      %31 = sbr.rel (0) target = $region25
    $region24: #{graphsn_forward.1} parent=1 // pred_region
      _
    $region25: #{graphsn_forward.1} parent=1 // pred_fallthru
      _
    // Predicated region
    $region26: #{graphsn_forward.1} parent=1 // pred_check
      _
    $region27: #{graphsn_forward.1} parent=1 // pred_check_branch
      %33 = sbr.rel (0) target = $region29
    $region28: #{graphsn_forward.1} parent=1 // pred_region
      _
    $region29: #{graphsn_forward.1} parent=1 // pred_fallthru
      _
    // Predicated region
    $region30: #{graphsn_forward.1} parent=1 // pred_check
      _
    $region31: #{graphsn_forward.1} parent=1 // pred_check_branch
      %35 = sbr.rel (0) target = $region33
    $region32: #{graphsn_forward.1} parent=1 // pred_region
      _
    $region33: #{graphsn_forward.1} parent=1 // pred_fallthru
      _
    // Predicated region
    $region34: #{graphsn_forward.1} parent=1 // pred_check
      _
    $region35: #{graphsn_forward.1} parent=1 // pred_check_branch
      %37 = sbr.rel (0) target = $region37
    $region36: #{graphsn_forward.1} parent=1 // pred_region
      _
    $region37: #{graphsn_forward.1} parent=1 // pred_fallthru
      _
    // Predicated region
    $region38: #{graphsn_forward.1} parent=1 // pred_check
      _
    $region39: #{graphsn_forward.1} parent=1 // pred_check_branch
      %39 = sbr.rel (0) target = $region41
    $region40: #{graphsn_forward.1} parent=1 // pred_region
      _
    $region41: #{graphsn_forward.1} parent=1 // pred_fallthru
      _
    // Predicated region
    $region42: #{graphsn_forward.1} parent=1 // pred_check
      _
    $region43: #{graphsn_forward.1} parent=1 // pred_check_branch
      %41 = sbr.rel (0) target = $region45
    $region44: #{graphsn_forward.1} parent=1 // pred_region
      _
    $region45: #{graphsn_forward.1} parent=1 // pred_fallthru
      _
    // Predicated region
    $region46: #{graphsn_forward.1} parent=1 // pred_check
      _
    $region47: #{graphsn_forward.1} parent=1 // pred_check_branch
      %43 = sbr.rel (0) target = $region49
    $region48: #{graphsn_forward.1} parent=1 // pred_region
      _
    $region49: #{graphsn_forward.1} parent=1 // pred_fallthru
      _
    // Predicated region
    $region50: #{graphsn_forward.1} parent=1 // pred_check
      _
    $region51: #{graphsn_forward.1} parent=1 // pred_check_branch
      %45 = sbr.rel (0) target = $region53
    $region52: #{graphsn_forward.1} parent=1 // pred_region
      _
    $region53: #{graphsn_forward.1} parent=1 // pred_fallthru
      _
    %s47 = sld [smem:[#allocation2]]
    %v48 = vld [vmem:[%s1] sm:$0xf]
    %v49 = vld [vmem:[%s1 + $0x4] sm:$0xf]
    %v50 = vld [vmem:[%s2] sm:$0xf]
    %v51 = vld [vmem:[%s2 + $0x4] sm:$0xf]
    %v52 = vld [vmem:[%s1] sm:$0xf]
    %v53 = vld [vmem:[%s1 + $0x4] sm:$0xf]
    %v54 = vld [vmem:[%s2] sm:$0xf]
    %v55 = vld [vmem:[%s2 + $0x4] sm:$0xf]
    %v56 = vlaneseq
    %v57 = vshrl.u32 %v56, 7
    %v58 = vlaneseq
    %v59 = vand.u32 %v58, 127
    %vm60 = vcmp.eq.s32.totalorder %v57, %v59
    %v61 = vunpack.c.l.bf16 %v52
    %v62 = vunpack.c.l.bf16 %v53
    %v63 = vsel %vm60, 1, 0
    %vm64 = vcmp.eq.s32.totalorder %v63, 1
    %v65 = vsel %vm64, %v61, 0.0
    %v66 = vsel %vm64, %v62, 0.0
    %vm67 = vcmask 64512
    %v68 = vsel %vm67, %v65, 0.0
    %69 = vadd.xlane.f32.xlu0 %v68
    %v70 = vpop.xlane.xlu0 %69
    %v71 = vsel %vm67, %v66, 0.0
    %72 = vadd.xlane.f32.xlu0 %v71
    %v73 = vpop.xlane.xlu0 %72
    %s74 = ssub.f32 %s47, 1.0
    %v75 = vstv %s74
    %v76 = vmul.f32 %v75, %v70
    %v77 = vmul.f32 %v75, %v73
    %v78 = vunpack.c.l.bf16 %v54
    %v79 = vunpack.c.l.bf16 %v55
    %v80 = vmul.f32 %v76, %v78
    %v81 = vmul.f32 %v77, %v79
    %v83 = vsel %vm67, %v48, 0
    %vm85 = vcmask 1043456
    %v87 = vsel %vm85, %v50, 0
    %89 = vmatprep.subr.bf16.mxu0 0
    %90 = vmatpush1.bf16.msra.mxu0 0
    %91 = vmatprep.subr.bf16.mxu0 0
    %92 = vmatpush1.bf16.msra.mxu0 0
    %93 = vmatprep.subr.bf16.mxu0 0
    %94 = vmatpush1.bf16.msra.mxu0 0
    %95 = vmatprep.subr.bf16.mxu0 0
    %96 = vmatpush1.bf16.msra.mxu0 0
    %97 = vmatprep.subr.bf16.mxu0 0
    %98 = vmatpush1.bf16.msra.mxu0 0
    %99 = vmatprep.subr.bf16.mxu0 0
    %100 = vmatpush1.bf16.msra.mxu0 0
    %101 = vmatprep.subr.bf16.mxu0 0
    %102 = vmatpush1.bf16.msra.mxu0 0
    %103 = vmatprep.subr.bf16.mxu0 0
    %104 = vmatpush1.bf16.msra.mxu0 %v87
    %105 = vmatprep.subr.bf16.mxu0 0
    %106 = vmatpush2.bf16.msra.mxu0 0
    %107 = vmatprep.subr.bf16.mxu0 0
    %108 = vmatpush2.bf16.msra.mxu0 0
    %109 = vmatprep.subr.bf16.mxu0 0
    %110 = vmatpush2.bf16.msra.mxu0 0
    %111 = vmatprep.subr.bf16.mxu0 0
    %112 = vmatpush2.bf16.msra.mxu0 0
    %113 = vmatprep.subr.bf16.mxu0 0
    %114 = vmatpush2.bf16.msra.mxu0 0
    %115 = vmatprep.subr.bf16.mxu0 0
    %116 = vmatpush2.bf16.msra.mxu0 0
    %117 = vmatprep.subr.bf16.mxu0 0
    %118 = vmatpush2.bf16.msra.mxu0 0
    %119 = vmatprep.subr.bf16.mxu0 0
    %120 = vmatpush2.bf16.msra.mxu0 0
    %121 = vmatprep.mubr.bf16.mxu0 0
    %122 = vmatmul.mubr.bf16.gmra.mxu0 %v83
    %v123 = vpop.f32.mrf.mxu0
    %v124 = vadd.f32 %v80, %v123
    %v125 = vpop.f32.mrf.mxu0
    %v126 = vpop.f32.mrf.mxu0
    %v127 = vpop.f32.mrf.mxu0
    %128 = vdwg.mxu0
    %v130 = vsel %vm67, %v49, 0
    %v133 = vsel %vm85, %v51, 0
    %135 = vmatprep.subr.bf16.mxu0 0
    %136 = vmatpush1.bf16.msra.mxu0 0
    %137 = vmatprep.subr.bf16.mxu0 0
    %138 = vmatpush1.bf16.msra.mxu0 0
    %139 = vmatprep.subr.bf16.mxu0 0
    %140 = vmatpush1.bf16.msra.mxu0 0
    %141 = vmatprep.subr.bf16.mxu0 0
    %142 = vmatpush1.bf16.msra.mxu0 0
    %143 = vmatprep.subr.bf16.mxu0 0
    %144 = vmatpush1.bf16.msra.mxu0 0
    %145 = vmatprep.subr.bf16.mxu0 0
    %146 = vmatpush1.bf16.msra.mxu0 0
    %147 = vmatprep.subr.bf16.mxu0 0
    %148 = vmatpush1.bf16.msra.mxu0 0
    %149 = vmatprep.subr.bf16.mxu0 0
    %150 = vmatpush1.bf16.msra.mxu0 %v133
    %151 = vmatprep.subr.bf16.mxu0 0
    %152 = vmatpush2.bf16.msra.mxu0 0
    %153 = vmatprep.subr.bf16.mxu0 0
    %154 = vmatpush2.bf16.msra.mxu0 0
    %155 = vmatprep.subr.bf16.mxu0 0
    %156 = vmatpush2.bf16.msra.mxu0 0
    %157 = vmatprep.subr.bf16.mxu0 0
    %158 = vmatpush2.bf16.msra.mxu0 0
    %159 = vmatprep.subr.bf16.mxu0 0
    %160 = vmatpush2.bf16.msra.mxu0 0
    %161 = vmatprep.subr.bf16.mxu0 0
    %162 = vmatpush2.bf16.msra.mxu0 0
    %163 = vmatprep.subr.bf16.mxu0 0
    %164 = vmatpush2.bf16.msra.mxu0 0
    %165 = vmatprep.subr.bf16.mxu0 0
    %166 = vmatpush2.bf16.msra.mxu0 0
    %167 = vmatprep.mubr.bf16.mxu0 0
    %168 = vmatmul.mubr.bf16.gmra.mxu0 %v130
    %v169 = vpop.f32.mrf.mxu0
    %v170 = vadd.f32 %v81, %v169
    %v171 = vpop.f32.mrf.mxu0
    %v172 = vpop.f32.mrf.mxu0
    %v173 = vpop.f32.mrf.mxu0
    %174 = vdwg.mxu0
    %v175 = vpack.c.bf16 %v170, %v124
    %v176 = vld [vmem:[%s3] sm:$0xf]
    %v177 = vld [vmem:[%s3 + $0x4] sm:$0xf]
    %v178 = vld [vmem:[%s3 + $0x8] sm:$0xf]
    %v179 = vld [vmem:[%s3 + $0xc] sm:$0xf]
    %v180 = vld [vmem:[%s3 + $0x10] sm:$0xf]
    %v181 = vld [vmem:[%s3 + $0x14] sm:$0xf]
    %v182 = vld [vmem:[%s3 + $0x18] sm:$0xf]
    %v183 = vld [vmem:[%s3 + $0x1c] sm:$0xf]
    %v184 = vld [vmem:[%s3 + $0x20] sm:$0xf]
    %v185 = vld [vmem:[%s3 + $0x24] sm:$0xf]
    %v186 = vld [vmem:[%s3 + $0x28] sm:$0xf]
    %v187 = vld [vmem:[%s3 + $0x2c] sm:$0xf]
    %v188 = vld [vmem:[%s3 + $0x30] sm:$0xf]
    %v189 = vld [vmem:[%s3 + $0x34] sm:$0xf]
    %v190 = vld [vmem:[%s3 + $0x38] sm:$0xf]
    %v191 = vld [vmem:[%s3 + $0x3c] sm:$0xf]
    %v192 = vld [vmem:[%s4] sm:$0x1]
    %v194 = vlaneseq
    %v195 = vshrl.u32 %v194, 7
    %v196 = vsub.s32 0, %v195
    %v197 = vrot.slane %v192, %v196
    %v215 = vunpack.c.l.b16 %v176
    %v216 = vunpack.c.l.b16 %v177
    %v217 = vunpack.c.l.b16 %v178
    %v218 = vunpack.c.l.b16 %v179
    %v219 = vunpack.c.l.b16 %v180
    %v220 = vunpack.c.l.b16 %v181
    %v221 = vunpack.c.l.b16 %v182
    %v222 = vunpack.c.l.b16 %v183
    %v223 = vunpack.c.l.b16 %v184
    %v224 = vunpack.c.l.b16 %v185
    %v225 = vunpack.c.l.b16 %v186
    %v226 = vunpack.c.l.b16 %v187
    %v227 = vunpack.c.l.b16 %v188
    %v228 = vunpack.c.l.b16 %v189
    %v229 = vunpack.c.l.b16 %v190
    %v230 = vunpack.c.l.b16 %v191
    %v231 = vpack.c.b16 %v216, %v215
    %v232 = vpack.c.b16 %v218, %v217
    %v233 = vpack.c.b16 %v220, %v219
    %v234 = vpack.c.b16 %v222, %v221
    %v235 = vpack.c.b16 %v224, %v223
    %v236 = vpack.c.b16 %v226, %v225
    %v237 = vpack.c.b16 %v228, %v227
    %v238 = vpack.c.b16 %v230, %v229
    %247 = vmatprep.subr.bf16.mxu0 0
    %248 = vmatpush1.bf16.msra.mxu0 %v238
    %249 = vmatprep.subr.bf16.mxu0 0
    %250 = vmatpush1.bf16.msra.mxu0 %v237
    %251 = vmatprep.subr.bf16.mxu0 0
    %252 = vmatpush1.bf16.msra.mxu0 %v236
    %253 = vmatprep.subr.bf16.mxu0 0
    %254 = vmatpush1.bf16.msra.mxu0 %v235
    %255 = vmatprep.subr.bf16.mxu0 0
    %256 = vmatpush1.bf16.msra.mxu0 %v234
    %257 = vmatprep.subr.bf16.mxu0 0
    %258 = vmatpush1.bf16.msra.mxu0 %v233
    %259 = vmatprep.subr.bf16.mxu0 0
    %260 = vmatpush1.bf16.msra.mxu0 %v232
    %261 = vmatprep.subr.bf16.mxu0 0
    %262 = vmatpush1.bf16.msra.mxu0 %v231
    %263 = vmatprep.subr.bf16.mxu0 0
    %264 = vmatpush2.bf16.msra.mxu0 0
    %265 = vmatprep.subr.bf16.mxu0 0
    %266 = vmatpush2.bf16.msra.mxu0 0
    %267 = vmatprep.subr.bf16.mxu0 0
    %268 = vmatpush2.bf16.msra.mxu0 0
    %269 = vmatprep.subr.bf16.mxu0 0
    %270 = vmatpush2.bf16.msra.mxu0 0
    %271 = vmatprep.subr.bf16.mxu0 0
    %272 = vmatpush2.bf16.msra.mxu0 0
    %273 = vmatprep.subr.bf16.mxu0 0
    %274 = vmatpush2.bf16.msra.mxu0 0
    %275 = vmatprep.subr.bf16.mxu0 0
    %276 = vmatpush2.bf16.msra.mxu0 0
    %277 = vmatprep.subr.bf16.mxu0 0
    %278 = vmatpush2.bf16.msra.mxu0 0
    %279 = vmatprep.mubr.bf16.mxu0 0
    %280 = vmatmul.mubr.bf16.gmra.mxu0 %v175
    %v281 = vpop.f32.mrf.mxu0
    %v282 = vadd.f32 %v197, %v281
    %v283 = vpop.f32.mrf.mxu0
    %v284 = vpop.f32.mrf.mxu0
    %v285 = vadd.f32 %v197, %v284
    %v286 = vpop.f32.mrf.mxu0
    %287 = vdwg.mxu0
    %v288 = vmax.f32 %v282, 0.0
    %v289 = vmax.f32 %v285, 0.0
    %v290 = vadd.f32 %v288, %v289
    %291 = vadd.xlane.f32.xlu0 %v290
    %v292 = vpop.xlane.xlu0 %291
    %v293 = vmul.f32 %v288, %v288
    %v294 = vmul.f32 %v289, %v289
    %v295 = vadd.f32 %v293, %v294
    %296 = vadd.xlane.f32.xlu0 %v295
    %v297 = vpop.xlane.xlu0 %296
    %v298 = vmul.f32 %v292, 0.015625
    %v299 = vmul.f32 %v297, 0.015625
    %v300 = vmul.f32 %v298, %v298
    %v301 = vsub.f32 %v299, %v300
    %v302 = vmax.f32 %v301, 0.0
    %v303 = vadd.f32 %v302, 1e-05
    %v304 = vrsqrt.pop %v303
    %v305 = vld [vmem:[%s5] sm:$0xff]
    %v306 = vmul.f32 %v305, %v304
    %v307 = vld [vmem:[%s6] sm:$0xff]
    %v308 = vmul.f32 %v298, %v306
    %v309 = vsub.f32 %v307, %v308
    %311 = vset.pattern.permute.xlu0 0
    %312 = vperm.xlu0 %311, %v306
    %v313 = vpop.permute.xlu0 %312
    %v315 = vmul.f32 %v288, %v313
    %v316 = vmul.f32 %v289, %v313
    %318 = vset.pattern.permute.xlu0 0
    %319 = vperm.xlu0 %318, %v309
    %v320 = vpop.permute.xlu0 %319
    %v322 = vadd.f32 %v315, %v320
    %v323 = vadd.f32 %v316, %v320
    %v324 = vpack.c.bf16 %v323, %v322
    %v325 = vld [vmem:[%s7] sm:$0xf]
    %v326 = vld [vmem:[%s7 + $0x4] sm:$0xf]
    %v327 = vld [vmem:[%s7 + $0x8] sm:$0xf]
    %v328 = vld [vmem:[%s7 + $0xc] sm:$0xf]
    %v329 = vld [vmem:[%s7 + $0x10] sm:$0xf]
    %v330 = vld [vmem:[%s7 + $0x14] sm:$0xf]
    %v331 = vld [vmem:[%s7 + $0x18] sm:$0xf]
    %v332 = vld [vmem:[%s7 + $0x1c] sm:$0xf]
    %v333 = vld [vmem:[%s7 + $0x20] sm:$0xf]
    %v334 = vld [vmem:[%s7 + $0x24] sm:$0xf]
    %v335 = vld [vmem:[%s7 + $0x28] sm:$0xf]
    %v336 = vld [vmem:[%s7 + $0x2c] sm:$0xf]
    %v337 = vld [vmem:[%s7 + $0x30] sm:$0xf]
    %v338 = vld [vmem:[%s7 + $0x34] sm:$0xf]
    %v339 = vld [vmem:[%s7 + $0x38] sm:$0xf]
    %v340 = vld [vmem:[%s7 + $0x3c] sm:$0xf]
    %v341 = vld [vmem:[%s8] sm:$0x1]
    %v343 = vlaneseq
    %v344 = vshrl.u32 %v343, 7
    %v345 = vsub.s32 0, %v344
    %v346 = vrot.slane %v341, %v345
    %v364 = vunpack.c.l.b16 %v325
    %v365 = vunpack.c.l.b16 %v326
    %v366 = vunpack.c.l.b16 %v327
    %v367 = vunpack.c.l.b16 %v328
    %v368 = vunpack.c.l.b16 %v329
    %v369 = vunpack.c.l.b16 %v330
    %v370 = vunpack.c.l.b16 %v331
    %v371 = vunpack.c.l.b16 %v332
    %v372 = vunpack.c.l.b16 %v333
    %v373 = vunpack.c.l.b16 %v334
    %v374 = vunpack.c.l.b16 %v335
    %v375 = vunpack.c.l.b16 %v336
    %v376 = vunpack.c.l.b16 %v337
    %v377 = vunpack.c.l.b16 %v338
    %v378 = vunpack.c.l.b16 %v339
    %v379 = vunpack.c.l.b16 %v340
    %v380 = vpack.c.b16 %v365, %v364
    %v381 = vpack.c.b16 %v367, %v366
    %v382 = vpack.c.b16 %v369, %v368
    %v383 = vpack.c.b16 %v371, %v370
    %v384 = vpack.c.b16 %v373, %v372
    %v385 = vpack.c.b16 %v375, %v374
    %v386 = vpack.c.b16 %v377, %v376
    %v387 = vpack.c.b16 %v379, %v378
    %396 = vmatprep.subr.bf16.mxu0 0
    %397 = vmatpush1.bf16.msra.mxu0 %v387
    %398 = vmatprep.subr.bf16.mxu0 0
    %399 = vmatpush1.bf16.msra.mxu0 %v386
    %400 = vmatprep.subr.bf16.mxu0 0
    %401 = vmatpush1.bf16.msra.mxu0 %v385
    %402 = vmatprep.subr.bf16.mxu0 0
    %403 = vmatpush1.bf16.msra.mxu0 %v384
    %404 = vmatprep.subr.bf16.mxu0 0
    %405 = vmatpush1.bf16.msra.mxu0 %v383
    %406 = vmatprep.subr.bf16.mxu0 0
    %407 = vmatpush1.bf16.msra.mxu0 %v382
    %408 = vmatprep.subr.bf16.mxu0 0
    %409 = vmatpush1.bf16.msra.mxu0 %v381
    %410 = vmatprep.subr.bf16.mxu0 0
    %411 = vmatpush1.bf16.msra.mxu0 %v380
    %412 = vmatprep.subr.bf16.mxu0 0
    %413 = vmatpush2.bf16.msra.mxu0 0
    %414 = vmatprep.subr.bf16.mxu0 0
    %415 = vmatpush2.bf16.msra.mxu0 0
    %416 = vmatprep.subr.bf16.mxu0 0
    %417 = vmatpush2.bf16.msra.mxu0 0
    %418 = vmatprep.subr.bf16.mxu0 0
    %419 = vmatpush2.bf16.msra.mxu0 0
    %420 = vmatprep.subr.bf16.mxu0 0
    %421 = vmatpush2.bf16.msra.mxu0 0
    %422 = vmatprep.subr.bf16.mxu0 0
    %423 = vmatpush2.bf16.msra.mxu0 0
    %424 = vmatprep.subr.bf16.mxu0 0
    %425 = vmatpush2.bf16.msra.mxu0 0
    %426 = vmatprep.subr.bf16.mxu0 0
    %427 = vmatpush2.bf16.msra.mxu0 0
    %428 = vmatprep.mubr.bf16.mxu0 0
    %429 = vmatmul.mubr.bf16.gmra.mxu0 %v324
    %v430 = vpop.f32.mrf.mxu0
    %v431 = vadd.f32 %v346, %v430
    %v432 = vpop.f32.mrf.mxu0
    %v433 = vpop.f32.mrf.mxu0
    %v434 = vadd.f32 %v346, %v433
    %v435 = vpop.f32.mrf.mxu0
    %436 = vdwg.mxu0
    %v437 = vmax.f32 %v431, 0.0
    %v438 = vmax.f32 %v434, 0.0
    %v439 = vadd.f32 %v437, %v438
    %440 = vadd.xlane.f32.xlu0 %v439
    %v441 = vpop.xlane.xlu0 %440
    %v442 = vmul.f32 %v437, %v437
    %v443 = vmul.f32 %v438, %v438
    %v444 = vadd.f32 %v442, %v443
    %445 = vadd.xlane.f32.xlu0 %v444
    %v446 = vpop.xlane.xlu0 %445
    %v447 = vmul.f32 %v441, 0.015625
    %v448 = vmul.f32 %v446, 0.015625
    %v449 = vmul.f32 %v447, %v447
    %v450 = vsub.f32 %v448, %v449
    %v451 = vmax.f32 %v450, 0.0
    %v452 = vadd.f32 %v451, 1e-05
    %v453 = vrsqrt.pop %v452
    %v454 = vld [vmem:[%s9] sm:$0xff]
    %v455 = vmul.f32 %v454, %v453
    %v456 = vld [vmem:[%s10] sm:$0xff]
    %v457 = vmul.f32 %v447, %v455
    %v458 = vsub.f32 %v456, %v457
    %460 = vset.pattern.permute.xlu0 0
    %461 = vperm.xlu0 %460, %v455
    %v462 = vpop.permute.xlu0 %461
    %v464 = vmul.f32 %v437, %v462
    %v465 = vmul.f32 %v438, %v462
    %467 = vset.pattern.permute.xlu0 0
    %468 = vperm.xlu0 %467, %v458
    %v469 = vpop.permute.xlu0 %468
    %v471 = vadd.f32 %v464, %v469
    %v472 = vadd.f32 %v465, %v469
    %v473 = vpack.c.bf16 %v472, %v471
    %v474 = vld [vmem:[%s11] sm:$0xf]
    %v475 = vld [vmem:[%s11 + $0x4] sm:$0xf]
    %v476 = vld [vmem:[%s11 + $0x8] sm:$0xf]
    %v477 = vld [vmem:[%s11 + $0xc] sm:$0xf]
    %v478 = vld [vmem:[%s11 + $0x10] sm:$0xf]
    %v479 = vld [vmem:[%s11 + $0x14] sm:$0xf]
    %v480 = vld [vmem:[%s11 + $0x18] sm:$0xf]
    %v481 = vld [vmem:[%s11 + $0x1c] sm:$0xf]
    %v482 = vld [vmem:[%s11 + $0x20] sm:$0xf]
    %v483 = vld [vmem:[%s11 + $0x24] sm:$0xf]
    %v484 = vld [vmem:[%s11 + $0x28] sm:$0xf]
    %v485 = vld [vmem:[%s11 + $0x2c] sm:$0xf]
    %v486 = vld [vmem:[%s11 + $0x30] sm:$0xf]
    %v487 = vld [vmem:[%s11 + $0x34] sm:$0xf]
    %v488 = vld [vmem:[%s11 + $0x38] sm:$0xf]
    %v489 = vld [vmem:[%s11 + $0x3c] sm:$0xf]
    %v490 = vld [vmem:[%s12] sm:$0x1]
    %v492 = vlaneseq
    %v493 = vshrl.u32 %v492, 7
    %v494 = vsub.s32 0, %v493
    %v495 = vrot.slane %v490, %v494
    %v513 = vunpack.c.l.b16 %v474
    %v514 = vunpack.c.l.b16 %v475
    %v515 = vunpack.c.l.b16 %v476
    %v516 = vunpack.c.l.b16 %v477
    %v517 = vunpack.c.l.b16 %v478
    %v518 = vunpack.c.l.b16 %v479
    %v519 = vunpack.c.l.b16 %v480
    %v520 = vunpack.c.l.b16 %v481
    %v521 = vunpack.c.l.b16 %v482
    %v522 = vunpack.c.l.b16 %v483
    %v523 = vunpack.c.l.b16 %v484
    %v524 = vunpack.c.l.b16 %v485
    %v525 = vunpack.c.l.b16 %v486
    %v526 = vunpack.c.l.b16 %v487
    %v527 = vunpack.c.l.b16 %v488
    %v528 = vunpack.c.l.b16 %v489
    %v529 = vpack.c.b16 %v514, %v513
    %v530 = vpack.c.b16 %v516, %v515
    %v531 = vpack.c.b16 %v518, %v517
    %v532 = vpack.c.b16 %v520, %v519
    %v533 = vpack.c.b16 %v522, %v521
    %v534 = vpack.c.b16 %v524, %v523
    %v535 = vpack.c.b16 %v526, %v525
    %v536 = vpack.c.b16 %v528, %v527
    %545 = vmatprep.subr.bf16.mxu0 0
    %546 = vmatpush1.bf16.msra.mxu0 %v536
    %547 = vmatprep.subr.bf16.mxu0 0
    %548 = vmatpush1.bf16.msra.mxu0 %v535
    %549 = vmatprep.subr.bf16.mxu0 0
    %550 = vmatpush1.bf16.msra.mxu0 %v534
    %551 = vmatprep.subr.bf16.mxu0 0
    %552 = vmatpush1.bf16.msra.mxu0 %v533
    %553 = vmatprep.subr.bf16.mxu0 0
    %554 = vmatpush1.bf16.msra.mxu0 %v532
    %555 = vmatprep.subr.bf16.mxu0 0
    %556 = vmatpush1.bf16.msra.mxu0 %v531
    %557 = vmatprep.subr.bf16.mxu0 0
    %558 = vmatpush1.bf16.msra.mxu0 %v530
    %559 = vmatprep.subr.bf16.mxu0 0
    %560 = vmatpush1.bf16.msra.mxu0 %v529
    %561 = vmatprep.subr.bf16.mxu0 0
    %562 = vmatpush2.bf16.msra.mxu0 0
    %563 = vmatprep.subr.bf16.mxu0 0
    %564 = vmatpush2.bf16.msra.mxu0 0
    %565 = vmatprep.subr.bf16.mxu0 0
    %566 = vmatpush2.bf16.msra.mxu0 0
    %567 = vmatprep.subr.bf16.mxu0 0
    %568 = vmatpush2.bf16.msra.mxu0 0
    %569 = vmatprep.subr.bf16.mxu0 0
    %570 = vmatpush2.bf16.msra.mxu0 0
    %571 = vmatprep.subr.bf16.mxu0 0
    %572 = vmatpush2.bf16.msra.mxu0 0
    %573 = vmatprep.subr.bf16.mxu0 0
    %574 = vmatpush2.bf16.msra.mxu0 0
    %575 = vmatprep.subr.bf16.mxu0 0
    %576 = vmatpush2.bf16.msra.mxu0 0
    %577 = vmatprep.mubr.bf16.mxu0 0
    %578 = vmatmul.mubr.bf16.gmra.mxu0 %v473
    %v579 = vpop.f32.mrf.mxu0
    %v580 = vadd.f32 %v495, %v579
    %v581 = vpop.f32.mrf.mxu0
    %v582 = vpop.f32.mrf.mxu0
    %v583 = vadd.f32 %v495, %v582
    %v584 = vpop.f32.mrf.mxu0
    %585 = vdwg.mxu0
    %v586 = vmax.f32 %v580, 0.0
    %v587 = vmax.f32 %v583, 0.0
    %588 = vst [vmem:[#allocation3] sm:$0xff] %v586
    %589 = vst [vmem:[#allocation3 + $0x8] sm:$0xff] %v587
    // Predicated region
    $region54: #{graphsn_forward.1} parent=1 // pred_check
      _
    $region55: #{graphsn_forward.1} parent=1 // pred_check_branch
      %591 = sbr.rel (0) target = $region57
    $region56: #{graphsn_forward.1} parent=1 // pred_region
      %s593 = ssub.s32 256, 256
      %594 = vsyncadd [#allocation4], %s593
      %s595 = sshll.u32 [#allocation3], 4
      %s596 = int_to_ptr.vmem [resolvable:$true] %s595
      %601 = dma.vmem_to_hbm [thread:$0]  %s596, 256, %s13, [#allocation4], 128, 128, 8
    $region57: #{graphsn_forward.1} parent=1 // pred_fallthru
      _
    // Predicated region
    $region58: #{graphsn_forward.1} parent=1 // pred_check
      _
    $region59: #{graphsn_forward.1} parent=1 // pred_check_branch
      %603 = sbr.rel (0) target = $region61
    $region60: #{graphsn_forward.1} parent=1 // pred_region
      %604 = dma.done [#allocation4], 256
    $region61: #{graphsn_forward.1} parent=1 // pred_fallthru
      _
    %605 = vsyncpa [#allocation4], 1

</llo_original>
